<compile_context>
chip_gen: v6e
topology: v6e:2x2x1
jax: 0.10.0
libtpu: 0.0.40
codegen_flags: <defaults>
</compile_context>

<pallas_src>
import functools

import jax
import jax.numpy as jnp
from jax.experimental import pallas as pl
from jax.experimental.pallas import tpu as pltpu


def _round_up(x, m):
    return (x + m - 1) // m * m


def _roll(x, shift, axis):
    # pltpu.roll with a guaranteed-positive static shift.
    size = x.shape[axis]
    return pltpu.roll(x, shift=shift % size, axis=axis)


def _sobel_kernel(gray_ref, out_ref):
    # gray_ref: (B, Hc, Wc) bfloat16 gray values in [0, 255]; rows/cols
    #           [0, H+2) x [0, W+2) hold the 1-px reflect-padded crop, the rest
    #           is zero fill.
    # out_ref:  (B, Hc, Wc) bfloat16 integer edge values in [0, 255];
    #           rows/cols [1, H+1) x [1, W+1) are the valid output window.
    B = gray_ref.shape[0]
    for b in range(B):  # static unroll over the images of this grid step
        gray = gray_ref[b].astype(jnp.float32)

        # Separable 3x3 Sobel via XLU rolls.  Wrap-around only touches the
        # padding ring / zero-fill region, which the wrapper crops away.
        g_xm1 = _roll(gray, 1, axis=1)    # gray[:, x-1]
        g_xp1 = _roll(gray, -1, axis=1)   # gray[:, x+1]
        s = g_xm1 + 2.0 * gray + g_xp1    # horizontal [1, 2, 1]
        d = g_xp1 - g_xm1                 # horizontal [-1, 0, 1]

        gx = _roll(d, 1, axis=0) + 2.0 * d + _roll(d, -1, axis=0)   # vertical [1, 2, 1]
        gy = _roll(s, -1, axis=0) - _roll(s, 1, axis=0)             # vertical [-1, 0, 1]

        # cv2.convertScaleAbs: saturate_cast<uint8>(|grad|).  |grad| of an
        # integer gray image is already integral, so no rounding is needed and a
        # single minimum saturates (gradients are >= 0 after abs).
        abs_gx = jnp.minimum(jnp.abs(gx), 255.0)
        abs_gy = jnp.minimum(jnp.abs(gy), 255.0)

        # cv2.addWeighted(abs_gx, 0.5, abs_gy, 0.5, 0): result <= 255, no clip.
        # 0..255 integers are exact in bf16; /255 happens in the wrapper.
        out_ref[b] = jnp.round(0.5 * (abs_gx + abs_gy)).astype(jnp.bfloat16)


def sobel_pallas(gray_canvas, block_images):
    """gray_canvas: (Npad, Hc, Wc) bf16 reflect-padded, (16,128)-aligned gray canvas.
    Returns (Npad, Hc, Wc) bf16 integer edge maps in [0, 255]."""
    Npad, Hc, Wc = gray_canvas.shape
    B = block_images
    assert Npad % B == 0

    # Scoped-VMEM hint: double-buffered bf16 in/out blocks plus ~12 full-plane
    # f32 roll-chain temporaries per image in the block.  Clamped to <= 56 MiB
    # so it is always legal on v7x (64 MiB physical) while lifting v5e's 16 MiB
    # default scoped limit.
    want = 2 * (2 * 2 * B * Hc * Wc * 2 + 12 * B * Hc * Wc * 4)
    vmem_limit = int(min(max(want, 32 * 1024 * 1024), 56 * 1024 * 1024))

    return pl.pallas_call(
        _sobel_kernel,
        out_shape=jax.ShapeDtypeStruct((Npad, Hc, Wc), jnp.bfloat16),
        grid=(Npad // B,),
        in_specs=[pl.BlockSpec((B, Hc, Wc), lambda n: (n, 0, 0))],
        out_specs=pl.BlockSpec((B, Hc, Wc), lambda n: (n, 0, 0)),
        compiler_params=pltpu.CompilerParams(
            dimension_semantics=("parallel",),
            vmem_limit_bytes=vmem_limit,
        ),
    )(gray_canvas)


def _pick_block_images(n):
    # Keep the grid at >= 2 steps (so ("parallel",) can split across v7x's two
    # TensorCores) while amortizing per-grid-step overhead; cap B at 2 so the
    # 448-scale roll-chain temporaries + double-buffered I/O fit v7x's 64 MiB VMEM.
    return 1 if n < 4 else 2


def _preprocess_single(img_u8_hwc, key, image_size, center_crop, random_crop):
    """Resize / CenterCrop / RandomCrop / RandomHorizontalFlip, fully traced."""
    img = img_u8_hwc.astype(jnp.float32)

    # T.Resize(image_size) -- bilinear.
    # TODO(synk): PIL's antialiased bilinear resize is not bit-exact vs jax.image.resize.
    img = jax.image.resize(img, (image_size[0], image_size[1], 3), method="bilinear")
    img = jnp.clip(jnp.round(img), 0.0, 255.0)  # PIL keeps uint8 pixels

    # T.CenterCrop(center_crop) -- static offsets.
    top = (image_size[0] - center_crop) // 2
    left = (image_size[1] - center_crop) // 2
    img = jax.lax.slice(img, (top, left, 0), (top + center_crop, left + center_crop, 3))

    # T.RandomCrop(random_crop) -- traced offsets (no host sync, no retrace).
    k_top, k_left, k_flip = jax.random.split(key, 3)
    max_off = center_crop - random_crop
    r_top = jax.random.randint(k_top, (), 0, max_off + 1)
    r_left = jax.random.randint(k_left, (), 0, max_off + 1)
    img = jax.lax.dynamic_slice(img, (r_top, r_left, 0), (random_crop, random_crop, 3))

    # T.RandomHorizontalFlip(p=0.5) -- traced coin flip.
    flip = jax.random.bernoulli(k_flip, 0.5)
    img = jnp.where(flip, img[:, ::-1, :], img)
    return img  # (random_crop, random_crop, 3) float32, integer pixel values


@functools.partial(
    jax.jit,
    static_argnames=("image_size", "center_crop", "random_crop", "block_images"))
def image_transform(images_u8, keys, image_size=(32, 32), center_crop=32,
                    random_crop=24, block_images=None):
    """Batched JAX/Pallas equivalent of ImageTranform.forward at demo sizes.

    images_u8: (N, H0, W0, 3) uint8 RGB. keys: (N, 2) PRNG keys (one per image).
    The real module uses image_size=(448, 448), CenterCrop(448), RandomCrop(392);
    the identical pipeline runs here at proportionally smaller sizes.
    Returns (N, 3, random_crop, random_crop) float32 in [0, 1].
    """
    crops = jax.vmap(
        lambda im, k: _preprocess_single(im, k, image_size, center_crop, random_crop)
    )(images_u8, keys)                                        # (N, rc, rc, 3) f32

    # cv2: RGB -> BGR -> GRAY  ==>  Y = 0.299 R + 0.587 G + 0.114 B, uint8-rounded.
    # Done in the wrapper so the kernel sees a single channel (3x less input DMA);
    # XLA fuses this with the reflect pad / canvas pad / bf16 cast below.
    gray = jnp.round(0.299 * crops[..., 0] + 0.587 * crops[..., 1]
                     + 0.114 * crops[..., 2])                 # (N, rc, rc)

    # Reflect pad 1 px (cv2 BORDER_REFLECT_101, Sobel's default border), then
    # zero-fill to a (16, 128)-aligned (bf16 sublane packing), lane-dense canvas.
    padded = jnp.pad(gray, ((0, 0), (1, 1), (1, 1)), mode="reflect")
    N, Hp, Wp = padded.shape
    Hc, Wc = _round_up(Hp, 16), _round_up(Wp, 128)
    canvas = jnp.pad(padded, ((0, 0), (0, Hc - Hp), (0, Wc - Wp)))
    canvas = canvas.astype(jnp.bfloat16)                      # exact for 0..255 ints
    # TODO(synk): a uint8 (or 4-pixels-per-uint32 packed) gray canvas would halve
    # the input DMA again -- biggest payoff on v5e.

    # Block several images per grid step; pad N to a multiple of the block.
    B = block_images if block_images is not None else _pick_block_images(N)
    Npad = _round_up(N, B)
    if Npad != N:
        canvas = jnp.pad(canvas, ((0, Npad - N), (0, 0), (0, 0)))

    edges = sobel_pallas(canvas, B)                           # (Npad, Hc, Wc) bf16 ints

    # Valid-region crop, then ToTensor's /255 + float32 cast in the wrapper
    # (halves kernel writeback; 0..255 integers are exact in bf16).
    H = W = random_crop
    gray01 = jax.lax.slice(edges, (0, 1, 1), (N, 1 + H, 1 + W)).astype(jnp.float32)
    gray01 = gray01 * (1.0 / 255.0)
    # torch.cat((img, img, img), 0): replicate the gray channel 3x (XLA fuses this).
    return jnp.broadcast_to(gray01[:, None, :, :], (N, 3, H, W))


if __name__ == "__main__":
    key = jax.random.PRNGKey(0)
    k_img, k_trans = jax.random.split(key)

    # Small synthetic batch of "PIL images": (2, 40, 48, 3) uint8 RGB.
    N = 2
    images = jax.random.randint(k_img, (N, 40, 48, 3), 0, 256,
                                dtype=jnp.int32).astype(jnp.uint8)
    keys = jax.random.split(k_trans, N)

    out = image_transform(images, keys, image_size=(32, 32),
                          center_crop=32, random_crop=24)
    out = jax.block_until_ready(out)

    assert out.shape == (N, 3, 24, 24), out.shape
    assert out.dtype == jnp.float32
    # All three output channels are identical (torch.cat of the same gray image).
    assert bool(jnp.all(out[:, 0] == out[:, 1]))
    assert bool(jnp.all(out[:, 0] == out[:, 2]))
    assert bool(jnp.all((out >= 0.0) & (out <= 1.0)))

    print("KERNEL_OK")
</pallas_src>

<mosaic_0001>
module attributes {stable_mosaic.version = 11 : i64} {
  func.func @_sobel_kernel(%arg0: i32, %arg1: memref<1x32x128xbf16, #tpu.memory_space<vmem>>, %arg2: memref<1x32x128xbf16, #tpu.memory_space<vmem>>) attributes {dimension_semantics = [#tpu.dimension_semantics<parallel>], iteration_bounds = array<i64: 2>, scalar_prefetch = 0 : i64, scratch_operands = 0 : i64, tpu.core_type = #tpu.core_type<tc>, window_params = [{transform_indices = @transform_0, window_bounds = array<i64: 1, 32, 128>}, {transform_indices = @transform_1, window_bounds = array<i64: 1, 32, 128>}]} {
    %c0 = arith.constant 0 : index
    %c0_0 = arith.constant 0 : index
    %c0_1 = arith.constant 0 : index
    %0 = vector.load %arg1[%c0, %c0_0, %c0_1] : memref<1x32x128xbf16, #tpu.memory_space<vmem>>, vector<1x32x128xbf16>
    %1 = vector.shape_cast %0 : vector<1x32x128xbf16> to vector<32x128xbf16>
    %2 = arith.extf %1 : vector<32x128xbf16> to vector<32x128xf32>
    %c1_i32 = arith.constant 1 : i32
    %3 = tpu.dynamic_rotate %2 by %c1_i32 dim 1 : vector<32x128xf32>, i32 -> vector<32x128xf32>
    %c127_i32 = arith.constant 127 : i32
    %4 = tpu.dynamic_rotate %2 by %c127_i32 dim 1 : vector<32x128xf32>, i32 -> vector<32x128xf32>
    %cst = arith.constant 2.000000e+00 : f32
    %5 = vector.broadcast %cst : f32 to vector<32x128xf32>
    %6 = arith.mulf %5, %2 : vector<32x128xf32>
    %7 = arith.addf %3, %6 : vector<32x128xf32>
    %8 = arith.addf %7, %4 : vector<32x128xf32>
    %9 = arith.subf %4, %3 : vector<32x128xf32>
    %c1_i32_2 = arith.constant 1 : i32
    %10 = tpu.dynamic_rotate %9 by %c1_i32_2 dim 0 : vector<32x128xf32>, i32 -> vector<32x128xf32>
    %cst_3 = arith.constant 2.000000e+00 : f32
    %11 = vector.broadcast %cst_3 : f32 to vector<32x128xf32>
    %12 = arith.mulf %11, %9 : vector<32x128xf32>
    %13 = arith.addf %10, %12 : vector<32x128xf32>
    %c31_i32 = arith.constant 31 : i32
    %14 = tpu.dynamic_rotate %9 by %c31_i32 dim 0 : vector<32x128xf32>, i32 -> vector<32x128xf32>
    %15 = arith.addf %13, %14 : vector<32x128xf32>
    %c31_i32_4 = arith.constant 31 : i32
    %16 = tpu.dynamic_rotate %8 by %c31_i32_4 dim 0 : vector<32x128xf32>, i32 -> vector<32x128xf32>
    %c1_i32_5 = arith.constant 1 : i32
    %17 = tpu.dynamic_rotate %8 by %c1_i32_5 dim 0 : vector<32x128xf32>, i32 -> vector<32x128xf32>
    %18 = arith.subf %16, %17 : vector<32x128xf32>
    %19 = math.absf %15 : vector<32x128xf32>
    %cst_6 = arith.constant 2.550000e+02 : f32
    %20 = vector.broadcast %cst_6 : f32 to vector<32x128xf32>
    %21 = arith.minimumf %19, %20 : vector<32x128xf32>
    %22 = math.absf %18 : vector<32x128xf32>
    %cst_7 = arith.constant 2.550000e+02 : f32
    %23 = vector.broadcast %cst_7 : f32 to vector<32x128xf32>
    %24 = arith.minimumf %22, %23 : vector<32x128xf32>
    %25 = arith.addf %21, %24 : vector<32x128xf32>
    %cst_8 = arith.constant 5.000000e-01 : f32
    %26 = vector.broadcast %cst_8 : f32 to vector<32x128xf32>
    %27 = arith.mulf %26, %25 : vector<32x128xf32>
    %28 = math.roundeven %27 : vector<32x128xf32>
    %29 = arith.truncf %28 : vector<32x128xf32> to vector<32x128xbf16>
    %c0_9 = arith.constant 0 : index
    %c0_10 = arith.constant 0 : index
    %c0_11 = arith.constant 0 : index
    %30 = vector.load %arg2[%c0_9, %c0_10, %c0_11] : memref<1x32x128xbf16, #tpu.memory_space<vmem>>, vector<1x32x128xbf16>
    %31 = vector.shape_cast %30 : vector<1x32x128xbf16> to vector<32x128xbf16>
    %32 = vector.shape_cast %29 : vector<32x128xbf16> to vector<1x32x128xbf16>
    tpu.vector_store %arg2[%c0_9, %c0_10, %c0_11], %32 {strides = array<i32>} : memref<1x32x128xbf16, #tpu.memory_space<vmem>>, vector<1x32x128xbf16>,
    return
  }
  func.func @transform_0(%arg0: i32) -> (i32, i32, i32) {
    %c0_i32 = arith.constant 0 : i32
    %c0_i32_0 = arith.constant 0 : i32
    %c0_i32_1 = arith.constant 0 : i32
    return %arg0, %c0_i32, %c0_i32_0 : i32, i32, i32
  }
  func.func @transform_1(%arg0: i32) -> (i32, i32, i32) {
    %c0_i32 = arith.constant 0 : i32
    %c0_i32_0 = arith.constant 0 : i32
    %c0_i32_1 = arith.constant 0 : i32
    return %arg0, %c0_i32, %c0_i32_0 : i32, i32, i32
  }
}

</mosaic_0001>

<llo_original>
// kernel: custom-call
$region0: #{custom-call}
  %s0 = inlined_call_operand.vmem [shape: f32[2,24,24,3], index: 0, kind: output, shape index: {}]

// kernel: image_transform.1
$region0: #{image_transform.1}
  #allocation0 [shape = 'u32[]', space=smem, size = 0x4, offset = 0x4, fixed_abs, tag = 'smem constant byte address 0x4 - core index']
  #allocation1 [shape = 'u32[144,128]{1,0:T(1,128)}', space=vmem, size = 0x12000, scoped, tag = 'internal scratch']
  %s0 = inlined_call_operand.vmem [shape: bf16[2,32,128], index: 0, kind: input, shape index: {}]
  %s1 = inlined_call_operand.vmem [shape: bf16[2,32,128], index: 1, kind: output, shape index: {}]
  %s2 = sld [smem:[#allocation0]]
  $region37: #{image_transform.1} parent=0
    _
  %s4 = ssub.s32 1, %s2
  %s5 = scalar_select 0, %s4, %s2
  loop: start=0, step=1, limit=4
  $region2: #{image_transform.1} parent=0 // loop_pre_header
    _
  $region3: #{image_transform.1} parent=0 // loop_header
    %s7 = sphi 0, %s11
    %p8 = scmp.ge.s32.totalorder %s7, 4
    %s17 = sphi 0, %s19
    %s20 = sphi 0, %s17
    %s21 = sphi 0, %s20
    %s37 = sphi 0, %s21
    %s43 = sphi 0, %s45
    %s46 = sphi 0, %s43
    %s47 = sphi 0, %s46
    %s63 = sphi 0, %s47
  $region4: #{image_transform.1} parent=0 // loop_header_branch
    %10 = sbr.rel (%p8) target = $region8
  $region5: #{image_transform.1} parent=0 // loop_body
    %s12 = ssub.s32 %s7, 1
    %s13 = ssub.s32 %s7, 2
    %s14 = sadd.s32 %s7, 1
    %s15 = ssub.s32 %s7, %s14
    %p16 = scmp.eq.s32.totalorder %s15, 0
    %s18 = sadd.s32 %s17, 1
    %s19 = scalar_select %p16, %s17, %s18
    %p22 = pneg %p16
    %p23 = scmp.eq.s32.totalorder %s7, 1
    %p24 = por %p22, %p23
    %p25 = scmp.ne.s32.totalorder %s17, %s20
    %p26 = scmp.eq.s32.totalorder %s7, 0
    %p27 = por %p25, %p26
    %p28 = scmp.ne.s32.totalorder %s17, %s20
    %p29 = scmp.eq.s32.totalorder %s12, 1
    %p30 = por %p28, %p29
    %p31 = scmp.ne.s32.totalorder %s20, %s21
    %p32 = scmp.eq.s32.totalorder %s12, 0
    %p33 = por %p31, %p32
    %p34 = scmp.ne.s32.totalorder %s20, %s21
    %p35 = scmp.eq.s32.totalorder %s13, 1
    %p36 = por %p34, %p35
    %p38 = scmp.ne.s32.totalorder %s21, %s37
    %p39 = scmp.eq.s32.totalorder %s13, 0
    %p40 = por %p38, %p39
    %s41 = ssub.s32 %s7, %s14
    %p42 = scmp.eq.s32.totalorder %s41, 0
    %s44 = sadd.s32 %s43, 1
    %s45 = scalar_select %p42, %s43, %s44
    %p48 = pneg %p42
    %p49 = scmp.eq.s32.totalorder %s7, 1
    %p50 = por %p48, %p49
    %p51 = scmp.ne.s32.totalorder %s43, %s46
    %p52 = scmp.eq.s32.totalorder %s7, 0
    %p53 = por %p51, %p52
    %p54 = scmp.ne.s32.totalorder %s43, %s46
    %p55 = scmp.eq.s32.totalorder %s12, 1
    %p56 = por %p54, %p55
    %p57 = scmp.ne.s32.totalorder %s46, %s47
    %p58 = scmp.eq.s32.totalorder %s12, 0
    %p59 = por %p57, %p58
    %p60 = scmp.ne.s32.totalorder %s46, %s47
    %p61 = scmp.eq.s32.totalorder %s13, 1
    %p62 = por %p60, %p61
    %p64 = scmp.ne.s32.totalorder %s47, %s63
    %p65 = scmp.eq.s32.totalorder %s13, 0
    %p66 = por %p64, %p65
    %p67 = scmp.le.s32.totalorder 1, %s7
    %p68 = scmp.lt.s32.totalorder %s7, 3
    %p69 = pnand %p67, %p68
    %p70 = pneg %p69
    // Predicated region
    $region9: #{image_transform.1} parent=5 // pred_check
      _
    $region10: #{image_transform.1} parent=5 // pred_check_branch
      %72 = sbr.rel (%p69) target = $region12
    $region11: #{image_transform.1} parent=5 // pred_region
      %s73 = ssub.s32 %s7, 1
    $region12: #{image_transform.1} parent=5 // pred_fallthru
      _
    %p74 = scmp.lt.s32.totalorder %s7, 2
    // Predicated region
    $region13: #{image_transform.1} parent=5 // pred_check
      %p75 = pneg %p74
    $region14: #{image_transform.1} parent=5 // pred_check_branch
      %77 = sbr.rel (%p75) target = $region16
    $region15: #{image_transform.1} parent=5 // pred_region
      // Predicated region
      $region17: #{image_transform.1} parent=15 // pred_check
        %p78 = pneg %p27
      $region18: #{image_transform.1} parent=15 // pred_check_branch
        %80 = sbr.rel (%p78) target = $region20
      $region19: #{image_transform.1} parent=15 // pred_region
        %p81 = scmp.lt.s32.totalorder %s7, 1
        %s82 = scalar_select %p81, %s7, 1
        %s83 = smul.addr %s82, 4
        %s84 = smul.addr %s83, 4
        %s85 = scalar_lea.vmem %s0, %s84
      $region20: #{image_transform.1} parent=15 // pred_fallthru
        _
    $region16: #{image_transform.1} parent=5 // pred_fallthru
      _
    %p86 = scmp.le.s32.totalorder 1, %s7
    %p87 = scmp.lt.s32.totalorder %s7, 3
    %p88 = pnand %p86, %p87
    %p89 = pneg %p88
    // Predicated region
    $region21: #{image_transform.1} parent=5 // pred_check
      _
    $region22: #{image_transform.1} parent=5 // pred_check_branch
      %91 = sbr.rel (%p88) target = $region24
    $region23: #{image_transform.1} parent=5 // pred_region
      %s92 = ssub.s32 %s7, 1
      %p93 = scmp.lt.s32.totalorder %s12, 1
      %s94 = scalar_select %p93, %s12, 1
      %s95 = smul.addr %s94, 4
      %s96 = smul.addr %s95, 4
      %s97 = scalar_lea.vmem %s0, %s96
      %p98 = pneg %p33
      %p99 = pneg %p30
      %p100 = pneg %p59
      %p101 = pneg %p56
      %p102 = scmp.lt.s32.totalorder %s12, 1
      %s103 = scalar_select %p102, %s12, 1
      %s104 = smul.addr %s103, 4
      %s105 = smul.addr %s104, 4
      %s106 = scalar_lea.vmem %s1, %s105
      %p107 = scmp.lt.s32.totalorder %s12, 1
      %s108 = scalar_select %p107, %s12, 1
      %s109 = smul.addr %s108, 4
      %s110 = smul.addr %s109, 4
      %s111 = scalar_lea.vmem %s0, %s110
      %p112 = scmp.lt.s32.totalorder %s12, 1
      %s113 = scalar_select %p112, %s12, 1
      %s114 = smul.addr %s113, 4
      %s115 = smul.addr %s114, 4
      %s116 = scalar_lea.vmem %s1, %s115
      %v117 = vld [vmem:[%s111] sm:$0xf]
      %v118 = vld [vmem:[%s111 + $0x4] sm:$0xf]
      %v119 = vld [vmem:[%s111 + $0x8] sm:$0xf]
      %v120 = vld [vmem:[%s111 + $0xc] sm:$0xf]
      %v121 = vunpack.c.l.bf16 %v117
      %v122 = vunpack.c.l.bf16 %v118
      %v123 = vunpack.c.l.bf16 %v119
      %v124 = vunpack.c.l.bf16 %v120
      %125 = vrot.lane.b32.xlu0 %v121, 1
      %v126 = vpop.permute.xlu0 %125
      %127 = vrot.lane.b32.xlu0 %v122, 1
      %v128 = vpop.permute.xlu0 %127
      %129 = vrot.lane.b32.xlu0 %v123, 1
      %v130 = vpop.permute.xlu0 %129
      %131 = vrot.lane.b32.xlu0 %v124, 1
      %v132 = vpop.permute.xlu0 %131
      %133 = vrot.lane.b32.xlu0 %v121, 127
      %v134 = vpop.permute.xlu0 %133
      %135 = vrot.lane.b32.xlu0 %v122, 127
      %v136 = vpop.permute.xlu0 %135
      %137 = vrot.lane.b32.xlu0 %v123, 127
      %v138 = vpop.permute.xlu0 %137
      %139 = vrot.lane.b32.xlu0 %v124, 127
      %v140 = vpop.permute.xlu0 %139
      %v141 = vmul.f32 %v121, 2.0
      %v142 = vmul.f32 %v122, 2.0
      %v143 = vmul.f32 %v123, 2.0
      %v144 = vmul.f32 %v124, 2.0
      %v145 = vadd.f32 %v126, %v141
      %v146 = vadd.f32 %v128, %v142
      %v147 = vadd.f32 %v130, %v143
      %v148 = vadd.f32 %v132, %v144
      %v149 = vadd.f32 %v145, %v134
      %v150 = vadd.f32 %v146, %v136
      %v151 = vadd.f32 %v147, %v138
      %v152 = vadd.f32 %v148, %v140
      %v153 = vsub.f32 %v134, %v126
      %v154 = vsub.f32 %v136, %v128
      %v155 = vsub.f32 %v138, %v130
      %v156 = vsub.f32 %v140, %v132
      %v157 = vrot.slane %v153, 7
      %v158 = vrot.slane %v154, 7
      %v159 = vrot.slane %v155, 7
      %v160 = vrot.slane %v156, 7
      %v161 = vlaneseq
      %v162 = vshrl.u32 %v161, 7
      %vm163 = vcmp.lt.s32.totalorder %v162, 1
      %v164 = vsel %vm163, %v159, %v160
      %v165 = vsel %vm163, %v158, %v159
      %v166 = vsel %vm163, %v157, %v158
      %v167 = vsel %vm163, %v160, %v157
      %v168 = vmul.f32 %v153, 2.0
      %v169 = vmul.f32 %v154, 2.0
      %v170 = vmul.f32 %v155, 2.0
      %v171 = vmul.f32 %v156, 2.0
      %v172 = vadd.f32 %v167, %v168
      %v173 = vadd.f32 %v166, %v169
      %v174 = vadd.f32 %v165, %v170
      %v175 = vadd.f32 %v164, %v171
      %v176 = vrot.slane %v153, 1
      %v177 = vrot.slane %v154, 1
      %v178 = vrot.slane %v155, 1
      %v179 = vrot.slane %v156, 1
      %vm180 = vcmp.lt.s32.totalorder %v162, 7
      %v181 = vsel %vm180, %v178, %v179
      %v182 = vsel %vm180, %v177, %v178
      %v183 = vsel %vm180, %v176, %v177
      %v184 = vsel %vm180, %v179, %v176
      %v185 = vadd.f32 %v172, %v183
      %v186 = vadd.f32 %v173, %v182
      %v187 = vadd.f32 %v174, %v181
      %v188 = vadd.f32 %v175, %v184
      %v189 = vrot.slane %v149, 1
      %v190 = vrot.slane %v150, 1
      %v191 = vrot.slane %v151, 1
      %v192 = vrot.slane %v152, 1
      %v193 = vsel %vm180, %v191, %v192
      %v194 = vsel %vm180, %v190, %v191
      %v195 = vsel %vm180, %v189, %v190
      %v196 = vsel %vm180, %v192, %v189
      %v197 = vrot.slane %v149, 7
      %v198 = vrot.slane %v150, 7
      %v199 = vrot.slane %v151, 7
      %v200 = vrot.slane %v152, 7
      %v201 = vsel %vm163, %v199, %v200
      %v202 = vsel %vm163, %v198, %v199
      %v203 = vsel %vm163, %v197, %v198
      %v204 = vsel %vm163, %v200, %v197
      %v205 = vsub.f32 %v195, %v204
      %v206 = vsub.f32 %v194, %v203
      %v207 = vsub.f32 %v193, %v202
      %v208 = vsub.f32 %v196, %v201
      %v209 = vand.u32 2147483647, %v185
      %v210 = vand.u32 2147483647, %v186
      %v211 = vand.u32 2147483647, %v187
      %v212 = vand.u32 2147483647, %v188
      %v213 = vmin.f32 %v209, 255.0
      %v214 = vmin.f32 %v210, 255.0
      %v215 = vmin.f32 %v211, 255.0
      %v216 = vmin.f32 %v212, 255.0
      %v217 = vand.u32 2147483647, %v205
      %v218 = vand.u32 2147483647, %v206
      %v219 = vand.u32 2147483647, %v207
      %v220 = vand.u32 2147483647, %v208
      %v221 = vmin.f32 %v217, 255.0
      %v222 = vmin.f32 %v218, 255.0
      %v223 = vmin.f32 %v219, 255.0
      %v224 = vmin.f32 %v220, 255.0
      %v225 = vadd.f32 %v213, %v221
      %v226 = vadd.f32 %v214, %v222
      %v227 = vadd.f32 %v215, %v223
      %v228 = vadd.f32 %v216, %v224
      %v229 = vmul.f32 %v225, 0.5
      %v230 = vmul.f32 %v226, 0.5
      %v231 = vmul.f32 %v227, 0.5
      %v232 = vmul.f32 %v228, 0.5
      %v233 = vround.ne.pseudo %v229
      %v234 = vround.ne.pseudo %v230
      %v235 = vround.ne.pseudo %v231
      %v236 = vround.ne.pseudo %v232
      %v237 = vpack.c.bf16 %v234, %v233
      %v238 = vpack.c.bf16 %v236, %v235
      %v241 = vunpack.c.l.b16 %v237
      %v242 = vunpack.c.h.b16 %v237
      %v243 = vunpack.c.l.b16 %v238
      %v244 = vunpack.c.h.b16 %v238
      %v245 = vpack.c.b16 %v241, %v241
      %v246 = vpack.c.b16 %v242, %v242
      %v247 = vpack.c.b16 %v243, %v243
      %v248 = vpack.c.b16 %v244, %v244
      %253 = vst [vmem:[%s116] sm:$0xf] %v245
      %254 = vst [vmem:[%s116 + $0x4] sm:$0xf] %v246
      %255 = vst [vmem:[%s116 + $0x8] sm:$0xf] %v247
      %256 = vst [vmem:[%s116 + $0xc] sm:$0xf] %v248
      %p257 = scmp.lt.s32.totalorder %s12, 1
      %s258 = scalar_select %p257, %s12, 1
      %s259 = smul.addr %s258, 4
      %s260 = smul.addr %s259, 4
      %s261 = scalar_lea.vmem %s1, %s260
      // Predicated region
      $region25: #{image_transform.1} parent=23 // pred_check
        %p262 = pneg %p56
      $region26: #{image_transform.1} parent=23 // pred_check_branch
        %264 = sbr.rel (%p262) target = $region28
      $region27: #{image_transform.1} parent=23 // pred_region
        _
      $region28: #{image_transform.1} parent=23 // pred_fallthru
        _
    $region24: #{image_transform.1} parent=5 // pred_fallthru
      _
    %p265 = scmp.le.s32.totalorder 2, %s7
    // Predicated region
    $region29: #{image_transform.1} parent=5 // pred_check
      %p266 = pneg %p265
    $region30: #{image_transform.1} parent=5 // pred_check_branch
      %268 = sbr.rel (%p266) target = $region32
    $region31: #{image_transform.1} parent=5 // pred_region
      %s269 = ssub.s32 %s7, 2
      // Predicated region
      $region33: #{image_transform.1} parent=31 // pred_check
        %p270 = pneg %p62
      $region34: #{image_transform.1} parent=31 // pred_check_branch
        %272 = sbr.rel (%p270) target = $region36
      $region35: #{image_transform.1} parent=31 // pred_region
        %p273 = scmp.lt.s32.totalorder %s13, 1
        %s274 = scalar_select %p273, %s13, 1
        %s275 = smul.addr %s274, 4
        %s276 = smul.addr %s275, 4
        %s277 = scalar_lea.vmem %s1, %s276
      $region36: #{image_transform.1} parent=31 // pred_fallthru
        _
    $region32: #{image_transform.1} parent=5 // pred_fallthru
      _
  $region6: #{image_transform.1} parent=0 // loop_footer
    %s11 = sadd.s32 1, %s7
  $region7: #{image_transform.1} parent=0 // loop_footer_branch
    %6 = sbr.rel target = $region3
  $region8: #{image_transform.1} parent=0 // loop_exit
    _

</llo_original>
